<compile_context>
chip_gen: v7x
topology: tpu7x:2x2x1
jax: 0.10.0
libtpu: 0.0.40
codegen_flags: <defaults>
</compile_context>

<pallas_src>
import functools

import numpy as np
import jax
import jax.numpy as jnp
from jax.experimental import pallas as pl
from jax.experimental.pallas import tpu as pltpu


# --------------------------------------------------------------------------- #
# Kernel
# --------------------------------------------------------------------------- #
def _rmsnorm_kernel(x_ref, scale_ref, o_ref, *, eps: float, downcast_dtype,
                    lane_chunk: int):
    # x_ref:     (TILE_ROWS, HIDDEN) block of hidden_states
    # scale_ref: (1, HIDDEN) learned scale, resident across the whole grid
    # o_ref:     (TILE_ROWS, HIDDEN) output block
    rows, hidden = x_ref.shape
    n_chunks = hidden // lane_chunk  # lane_chunk always divides hidden

    # Pass 1: per-row sum of squares accumulated in f32, chunk-by-chunk so the
    # compiler never has to hold a full f32 copy of the block in VMEM/vregs.
    ssq = jnp.zeros((rows, 1), dtype=jnp.float32)
    for c in range(n_chunks):
        xc = x_ref[:, pl.ds(c * lane_chunk, lane_chunk)].astype(jnp.float32)
        ssq = ssq + jnp.sum(xc * xc, axis=-1, keepdims=True)

    # variance = mean(x^2); rsqrt runs on the EUP (free slot under HBM time).
    inv_rms = jax.lax.rsqrt(ssq * (1.0 / float(hidden)) + eps)

    # Pass 2: normalize, (optionally) downcast to scale dtype, scale, store.
    # Re-reading x_ref from VMEM is essentially free (vld slots have slack).
    for c in range(n_chunks):
        sl = pl.ds(c * lane_chunk, lane_chunk)
        normed = x_ref[:, sl].astype(jnp.float32) * inv_rms
        if downcast_dtype is not None:
            normed = normed.astype(downcast_dtype)
        o_ref[:, sl] = (scale_ref[:, sl] * normed).astype(o_ref.dtype)


# --------------------------------------------------------------------------- #
# Tiling / budgeting helpers
# --------------------------------------------------------------------------- #
def _sublane_multiple(dtype) -> int:
    # f32 -> 8, bf16/f16 -> 16, int8/fp8 -> 32 (sub-32-bit dtypes pack sublanes)
    return 32 // np.dtype(dtype).itemsize


def _round_up(x: int, m: int) -> int:
    return ((x + m - 1) // m) * m


def _vmem_capacity_bytes() -> int:
    try:
        return int(pltpu.get_tpu_info().vmem_capacity_bytes)
    except Exception:
        return 64 << 20  # conservative fallback (v7x per-core VMEM)


def _default_target_block_bytes(vmem_cap_bytes: int) -> int:
    # v7x: 64 MiB VMEM -> ~6 MiB input blocks (2x(in+out) double buffers plus
    # f32 chunk temps stay well under ~40 MiB).  v5e/v6e: 128 MiB -> 8 MiB
    # blocks comfortably amortize the ~0.35 us per-grid-step overhead.
    if vmem_cap_bytes <= (64 << 20):
        return 6 << 20
    return 8 << 20


def _pick_lane_chunk(hidden: int) -> int:
    """Largest divisor of hidden that is a multiple of 128 and <= 1024."""
    if hidden <= 1024 or hidden % 128 != 0:
        return hidden
    for cand in (1024, 896, 768, 640, 512, 384, 256, 128):
        if hidden % cand == 0:
            return cand
    return hidden


def _pick_tile_rows(rows: int, hidden: int, in_dtype, out_dtype,
                    target_block_bytes: int) -> int:
    """Largest sublane-aligned row tile near the target block size.

    Prefers a tile that divides `rows` exactly (no partial tail block); if no
    nearby divisor exists we keep the bandwidth-optimal tile and let Pallas
    mask the partial last block (no HBM pad/slice copies).
    """
    itemsize = np.dtype(in_dtype).itemsize
    sublane = max(_sublane_multiple(in_dtype), _sublane_multiple(out_dtype))
    bytes_per_row = max(hidden * itemsize, 1)

    tile = max(sublane, (target_block_bytes // bytes_per_row) // sublane * sublane)
    tile = min(tile, _round_up(rows, sublane))

    if rows % tile != 0:
        # Look for a slightly smaller tile that divides rows exactly; accept it
        # only if it is not dramatically smaller than the bandwidth-optimal one.
        cand = tile - sublane
        while cand >= sublane and cand * 4 >= tile:
            if rows % cand == 0:
                return cand
            cand -= sublane
    return tile


# --------------------------------------------------------------------------- #
# Wrapper
# --------------------------------------------------------------------------- #
def llama_rmsnorm(hidden_states: jax.Array, scale: jax.Array, eps: float = 1e-6,
                  tile_rows: int | None = None,
                  target_block_bytes: int | None = None) -> jax.Array:
    """RMSNorm over the last axis of `hidden_states`, scaled by `scale`."""
    orig_shape = hidden_states.shape
    hidden = orig_shape[-1]
    rows = 1
    for d in orig_shape[:-1]:
        rows *= d

    # Output / downcast dtypes follow the module: keyed on scale.dtype.
    if scale.dtype in (jnp.float16, jnp.bfloat16):
        downcast_dtype = scale.dtype
        out_dtype = scale.dtype
        mul_dtype = scale.dtype
    else:
        downcast_dtype = None
        out_dtype = jnp.promote_types(scale.dtype, jnp.float32)
        mul_dtype = out_dtype

    vmem_cap = _vmem_capacity_bytes()
    if target_block_bytes is None:
        target_block_bytes = _default_target_block_bytes(vmem_cap)

    if tile_rows is None:
        tile_rows = _pick_tile_rows(rows, hidden, hidden_states.dtype, out_dtype,
                                    target_block_bytes)
    lane_chunk = _pick_lane_chunk(hidden)

    num_tiles = pl.cdiv(rows, tile_rows)

    # Free reshapes (no data movement): flatten leading dims, row-vector scale.
    x2d = hidden_states.reshape(rows, hidden)
    scale2d = scale.reshape(1, hidden).astype(mul_dtype)

    # VMEM budget: in/out double buffers + resident scale + f32 chunk
    # temporaries (upcast chunk, squared/normalized chunk, running accumulator
    # and inv_rms), clamped to physical VMEM capacity minus headroom.
    in_bytes = np.dtype(hidden_states.dtype).itemsize
    out_bytes = np.dtype(out_dtype).itemsize
    block_in = tile_rows * hidden * in_bytes
    block_out = tile_rows * hidden * out_bytes
    f32_temps = 3 * tile_rows * lane_chunk * 4 + 2 * tile_rows * 128 * 4
    vmem_needed = (2 * (block_in + block_out)
                   + 2 * hidden * np.dtype(mul_dtype).itemsize
                   + f32_temps)
    vmem_limit_bytes = max(32 << 20, _round_up(vmem_needed + (8 << 20), 1 << 20))
    vmem_limit_bytes = min(vmem_limit_bytes, max(vmem_cap - (8 << 20), 32 << 20))

    cost = pl.CostEstimate(
        flops=4 * rows * hidden,          # square, accumulate, normalize, scale
        transcendentals=rows,             # one rsqrt per row
        bytes_accessed=rows * hidden * (in_bytes + out_bytes)
        + hidden * np.dtype(mul_dtype).itemsize,
    )

    kernel = functools.partial(_rmsnorm_kernel, eps=eps,
                               downcast_dtype=downcast_dtype,
                               lane_chunk=lane_chunk)

    out2d = pl.pallas_call(
        kernel,
        out_shape=jax.ShapeDtypeStruct((rows, hidden), out_dtype),
        grid_spec=pltpu.PrefetchScalarGridSpec(
            num_scalar_prefetch=0,
            grid=(num_tiles,),
            in_specs=[
                pl.BlockSpec((tile_rows, hidden), lambda i: (i, 0)),
                pl.BlockSpec((1, hidden), lambda i: (0, 0)),
            ],
            out_specs=pl.BlockSpec((tile_rows, hidden), lambda i: (i, 0)),
        ),
        compiler_params=pltpu.CompilerParams(
            # "parallel" lets the runtime shard the row loop across both
            # TensorCores on v7x (no-op on single-TC v5e/v6e).  If a v7x trace
            # shows only one core streaming, switch this axis to
            # pltpu.CORE_PARALLEL (the kernel body is already core-agnostic).
            dimension_semantics=("parallel",),
            vmem_limit_bytes=vmem_limit_bytes,
        ),
        cost_estimate=cost,
    )(x2d, scale2d)

    return out2d.reshape(orig_shape)


# --------------------------------------------------------------------------- #
# Pure-JAX reference (mirrors the PyTorch module exactly)
# --------------------------------------------------------------------------- #
def _reference_rmsnorm(x, scale, eps=1e-6):
    variance = jnp.mean(x.astype(jnp.float32) ** 2, axis=-1, keepdims=True)
    normed = x.astype(jnp.float32) * jax.lax.rsqrt(variance + eps)
    if scale.dtype in (jnp.float16, jnp.bfloat16):
        normed = normed.astype(scale.dtype)
    return scale * normed


if __name__ == "__main__":
    eps = 1e-6
    key = jax.random.PRNGKey(0)
    k1, k2, k3, k4 = jax.random.split(key, 4)

    # --- Case 1: f32 input, f32 scale (module default init: ones) -----------
    x = jax.random.normal(k1, (2, 8, 128), dtype=jnp.float32)
    scale = jnp.ones((128,), dtype=jnp.float32)
    out = jax.block_until_ready(llama_rmsnorm(x, scale, eps=eps))
    ref = _reference_rmsnorm(x, scale, eps=eps)
    assert out.shape == x.shape and out.dtype == ref.dtype
    assert jnp.allclose(out, ref, atol=1e-5, rtol=1e-5), "f32 mismatch vs reference"

    # --- Case 2: bf16 input + bf16 scale, 15 rows (partial last row block, ---
    #     no pad/slice copies) -- exercises the downcast path ----------------
    x_bf16 = jax.random.normal(k2, (3, 5, 128), dtype=jnp.float32).astype(jnp.bfloat16)
    scale_bf16 = (1.0 + 0.1 * jax.random.normal(k3, (128,), dtype=jnp.float32)
                  ).astype(jnp.bfloat16)
    out_bf16 = jax.block_until_ready(llama_rmsnorm(x_bf16, scale_bf16, eps=eps))
    ref_bf16 = _reference_rmsnorm(x_bf16, scale_bf16, eps=eps)
    assert out_bf16.shape == x_bf16.shape and out_bf16.dtype == jnp.bfloat16
    assert jnp.allclose(out_bf16.astype(jnp.float32), ref_bf16.astype(jnp.float32),
                        atol=2e-2, rtol=2e-2), "bf16 mismatch vs reference"

    # --- Case 3: bf16 input + f32 scale (no downcast -> f32 output), --------
    #     hidden=2048 exercises the lane-chunked two-pass body (2 chunks) ----
    x3 = jax.random.normal(k4, (2, 8, 2048), dtype=jnp.float32).astype(jnp.bfloat16)
    scale3 = jnp.ones((2048,), dtype=jnp.float32)
    out3 = jax.block_until_ready(llama_rmsnorm(x3, scale3, eps=eps))
    ref3 = _reference_rmsnorm(x3, scale3, eps=eps)
    assert out3.shape == x3.shape and out3.dtype == jnp.float32
    assert jnp.allclose(out3, ref3, atol=1e-3, rtol=1e-3), "mixed-dtype mismatch"

    print("KERNEL_OK")
</pallas_src>

<mosaic_0001>
module attributes {stable_mosaic.version = 11 : i64} {
  func.func @_rmsnorm_kernel(%arg0: i32, %arg1: memref<16x128xf32, #tpu.memory_space<vmem>>, %arg2: memref<1x128xf32, #tpu.memory_space<vmem>>, %arg3: memref<16x128xf32, #tpu.memory_space<vmem>>) attributes {dimension_semantics = [#tpu.dimension_semantics<parallel>], iteration_bounds = array<i64: 1>, scalar_prefetch = 0 : i64, scratch_operands = 0 : i64, tpu.core_type = #tpu.core_type<tc>, window_params = [{transform_indices = @transform_0, window_bounds = array<i64: 16, 128>}, {pipeline_mode = #tpu.pipeline_mode<synchronous>, transform_indices = @transform_1, window_bounds = array<i64: 1, 128>}, {transform_indices = @transform_2, window_bounds = array<i64: 16, 128>}]} {
    %cst = arith.constant 0.000000e+00 : f32
    %0 = vector.broadcast %cst : f32 to vector<16x1xf32>
    %c0 = arith.constant 0 : index
    %c0_0 = arith.constant 0 : index
    %1 = vector.load %arg1[%c0, %c0_0] : memref<16x128xf32, #tpu.memory_space<vmem>>, vector<16x128xf32>
    %2 = arith.mulf %1, %1 : vector<16x128xf32>
    %cst_1 = arith.constant dense<0.000000e+00> : vector<16xf32>
    %3 = vector.multi_reduction <add>, %2, %cst_1 [1] : vector<16x128xf32> to vector<16xf32>
    %4 = vector.shape_cast %3 : vector<16xf32> to vector<16x1xf32>
    %5 = arith.addf %0, %4 : vector<16x1xf32>
    %cst_2 = arith.constant 7.812500e-03 : f32
    %6 = vector.broadcast %cst_2 : f32 to vector<16x1xf32>
    %7 = arith.mulf %5, %6 : vector<16x1xf32>
    %cst_3 = arith.constant 9.99999997E-7 : f32
    %8 = vector.broadcast %cst_3 : f32 to vector<16x1xf32>
    %9 = arith.addf %7, %8 : vector<16x1xf32>
    %10 = math.rsqrt %9 : vector<16x1xf32>
    %c0_4 = arith.constant 0 : index
    %c0_5 = arith.constant 0 : index
    %11 = vector.load %arg1[%c0_4, %c0_5] : memref<16x128xf32, #tpu.memory_space<vmem>>, vector<16x128xf32>
    %12 = vector.broadcast %10 : vector<16x1xf32> to vector<16x128xf32>
    %13 = arith.mulf %11, %12 : vector<16x128xf32>
    %c0_6 = arith.constant 0 : index
    %c0_7 = arith.constant 0 : index
    %14 = vector.load %arg2[%c0_6, %c0_7] : memref<1x128xf32, #tpu.memory_space<vmem>>, vector<1x128xf32>
    %15 = vector.broadcast %14 : vector<1x128xf32> to vector<16x128xf32>
    %16 = arith.mulf %15, %13 : vector<16x128xf32>
    %c0_8 = arith.constant 0 : index
    %c0_9 = arith.constant 0 : index
    %17 = vector.load %arg3[%c0_8, %c0_9] : memref<16x128xf32, #tpu.memory_space<vmem>>, vector<16x128xf32>
    tpu.vector_store %arg3[%c0_8, %c0_9], %16 {strides = array<i32>} : memref<16x128xf32, #tpu.memory_space<vmem>>, vector<16x128xf32>,
    return
  }
  func.func @transform_0(%arg0: i32) -> (i32, i32) {
    %c0_i32 = arith.constant 0 : i32
    %c0_i32_0 = arith.constant 0 : i32
    return %arg0, %c0_i32 : i32, i32
  }
  func.func @transform_1(%arg0: i32) -> (i32, i32) {
    %c0_i32 = arith.constant 0 : i32
    %c0_i32_0 = arith.constant 0 : i32
    %c0_i32_1 = arith.constant 0 : i32
    return %c0_i32, %c0_i32_0 : i32, i32
  }
  func.func @transform_2(%arg0: i32) -> (i32, i32) {
    %c0_i32 = arith.constant 0 : i32
    %c0_i32_0 = arith.constant 0 : i32
    return %arg0, %c0_i32 : i32, i32
  }
}

</mosaic_0001>

<llo_original>
// kernel: tpu_custom_call.1
$region0: #{tpu_custom_call.1}
  #allocation0 [shape = 'u32[]', space=smem, size = 0x4, offset = 0x4, fixed_abs, tag = 'smem constant byte address 0x4 - core index']
  #allocation1 [shape = 'u32[144,128]{1,0:T(1,128)}', space=vmem, size = 0x12000, scoped, tag = 'internal scratch']
  %s0 = inlined_call_operand.hbm [shape: f32[16,128], index: 0, kind: input, shape index: {}]
  %s1 = inlined_call_operand.vmem [shape: f32[1,128], index: 1, kind: input, shape index: {}]
  %s2 = inlined_call_operand.hbm [shape: f32[16,128], index: 2, kind: output, shape index: {}]
  %s3 = sld [smem:[#allocation0]]
  $region22: #{tpu_custom_call.1} parent=0
    _
  %s5 = ssub.s32 1, %s3
  %s6 = scalar_select 0, %s5, %s3
  $region1: #{tpu_custom_call.1} parent=0
    #allocation2 [shape = 'u8[8192]{0}', space=vmem, size = 0x2000, scoped, tag = 'input window, operand 0, single buffered']
    #allocation3 [shape = 's32[1]{0}', space=sflag, size = 0x4, scoped, tag = 'scoped memory for tpu_custom_call.1']
    #allocation4 [shape = 's32[1]{0}', space=sflag, size = 0x4, scoped, tag = 'scoped memory for tpu_custom_call.1']
    #allocation5 [shape = 'u8[8192]{0}', space=vmem, size = 0x2000, scoped, tag = 'output window, operand 0, single buffered']
    %7 = vsyncpa [#allocation3], 0
    %8 = vsyncpa [#allocation4], 0
    // Predicated region
    $region2: #{tpu_custom_call.1} parent=1 // pred_check
      _
    $region3: #{tpu_custom_call.1} parent=1 // pred_check_branch
      %10 = sbr.rel (0) target = $region5
    $region4: #{tpu_custom_call.1} parent=1 // pred_region
      %s12 = ssub.s32 256, 256
      %13 = vsyncadd [#allocation3], %s12
      %s14 = sshll.u32 [#allocation2], 4
      %s15 = int_to_ptr.vmem [resolvable:$true] %s14
      %20 = dma.hbm_to_vmem [thread:$0]  %s0, 256, %s15, [#allocation3], 128, 128, 8
    $region5: #{tpu_custom_call.1} parent=1 // pred_fallthru
      _
    // Predicated region
    $region6: #{tpu_custom_call.1} parent=1 // pred_check
      _
    $region7: #{tpu_custom_call.1} parent=1 // pred_check_branch
      %22 = sbr.rel (0) target = $region9
    $region8: #{tpu_custom_call.1} parent=1 // pred_region
      _
    $region9: #{tpu_custom_call.1} parent=1 // pred_fallthru
      _
    // Predicated region
    $region10: #{tpu_custom_call.1} parent=1 // pred_check
      _
    $region11: #{tpu_custom_call.1} parent=1 // pred_check_branch
      %24 = sbr.rel (0) target = $region13
    $region12: #{tpu_custom_call.1} parent=1 // pred_region
      %25 = dma.done [#allocation3], 256
    $region13: #{tpu_custom_call.1} parent=1 // pred_fallthru
      _
    %v26 = vld [vmem:[#allocation2] sm:$0xff]
    %v27 = vld [vmem:[#allocation2 + $0x8] sm:$0xff]
    %v28 = vmul.f32 %v26, %v26
    %v29 = vmul.f32 %v27, %v27
    %30 = vadd.xlane.f32.xlu0 %v28
    %v31 = vpop.xlane.xlu0 %30
    %32 = vadd.xlane.f32.xlu0 %v29
    %v33 = vpop.xlane.xlu0 %32
    %v34 = vadd.f32 %v31, 0.0
    %v35 = vadd.f32 %v33, 0.0
    %v36 = vmul.f32 %v34, 0.0078125
    %v37 = vmul.f32 %v35, 0.0078125
    %v38 = vadd.f32 %v36, 1e-06
    %v39 = vadd.f32 %v37, 1e-06
    %v40 = vrsqrt.pop %v38
    %v41 = vrsqrt.pop %v39
    %v42 = vmul.f32 %v26, %v40
    %v43 = vmul.f32 %v27, %v41
    %v44 = vld [vmem:[%s1] sm:$0x1]
    %v46 = vlaneseq
    %v47 = vshrl.u32 %v46, 7
    %v48 = vsub.s32 0, %v47
    %v49 = vrot.slane %v44, %v48
    %v51 = vmul.f32 %v49, %v42
    %v52 = vmul.f32 %v49, %v43
    %53 = vst [vmem:[#allocation5] sm:$0xff] %v51
    %54 = vst [vmem:[#allocation5 + $0x8] sm:$0xff] %v52
    // Predicated region
    $region14: #{tpu_custom_call.1} parent=1 // pred_check
      _
    $region15: #{tpu_custom_call.1} parent=1 // pred_check_branch
      %56 = sbr.rel (0) target = $region17
    $region16: #{tpu_custom_call.1} parent=1 // pred_region
      %s58 = ssub.s32 256, 256
      %59 = vsyncadd [#allocation4], %s58
      %s60 = sshll.u32 [#allocation5], 4
      %s61 = int_to_ptr.vmem [resolvable:$true] %s60
      %66 = dma.vmem_to_hbm [thread:$0]  %s61, 256, %s2, [#allocation4], 128, 128, 8
    $region17: #{tpu_custom_call.1} parent=1 // pred_fallthru
      _
    // Predicated region
    $region18: #{tpu_custom_call.1} parent=1 // pred_check
      _
    $region19: #{tpu_custom_call.1} parent=1 // pred_check_branch
      %68 = sbr.rel (0) target = $region21
    $region20: #{tpu_custom_call.1} parent=1 // pred_region
      %69 = dma.done [#allocation4], 256
    $region21: #{tpu_custom_call.1} parent=1 // pred_fallthru
      _
    %70 = vsyncpa [#allocation3], 1
    %71 = vsyncpa [#allocation4], 1

</llo_original>
